<compile_context>
chip_gen: v7x
topology: tpu7x:2x2x1
jax: 0.10.0
libtpu: 0.0.40
codegen_flags: <defaults>
</compile_context>

<pallas_src>
import jax
import jax.numpy as jnp
from jax.experimental import pallas as pl
from jax.experimental.pallas import tpu as pltpu


def logreg_kernel(x_ref, w_ref, b_ref, prob_ref):
    c = prob_ref.shape[-1]
    # MXU matmul (bf16/f32 operands, f32 accumulation).
    logits = jnp.dot(x_ref[...], w_ref[...], preferred_element_type=jnp.float32)
    # Slice off any class padding BEFORE the softmax so padded columns never
    # contribute to the row max or the denominator.
    logits = logits[:, :c] + b_ref[...]                 # (TM, C) + (1, C) broadcast
    m = jnp.max(logits, axis=1, keepdims=True)          # row-wise max for stability
    e = jnp.exp(logits - m)
    denom = jnp.sum(e, axis=1, keepdims=True)
    # Exact normalization (mem-bound kernel: the divide is free); the previous
    # approximate reciprocal was the source of the reference mismatch.
    prob_ref[...] = (e / denom).astype(prob_ref.dtype)


def _round_up(x, m):
    return (x + m - 1) // m * m


def pt_logreg_forward(X, W, b, *, tm=1024, mxu_dtype=jnp.bfloat16):
    """X: [N, D], W: [D, C], b: [1, C] (f32) -> prob [N, C] f32 (softmax rows)."""
    N, D = X.shape
    Dw, C = W.shape
    assert Dw == D and b.shape == (1, C)

    # Pad the classes to a lane-width multiple for the MXU RHS only; the bias and the
    # output keep the true C (narrow store, no wasted HBM write).
    C_pad = _round_up(C, 128)
    W_p = jnp.pad(W, ((0, 0), (0, C_pad - C))) if C_pad != C else W

    # bf16 MXU operands halve the dominant X read.  (Ideally the caller passes bf16
    # directly; this cast is a small extra XLA pass.)  Softmax math stays f32.
    x_bytes = jnp.dtype(mxu_dtype).itemsize
    X_in = X.astype(mxu_dtype)
    W_in = W_p.astype(mxu_dtype)
    b_in = b.astype(jnp.float32)

    # ---- Batch-dim tiling (ragged tail handled by Pallas; no pre-pad of X). ----
    # Prefer >= 2 tiles so the "parallel" grid axis can split across v7x's two TCs.
    TM = min(tm, _round_up(max(-(-N // 2), 1), 8))
    TM = max(TM, 8)
    if TM >= N:
        TM = N  # single block covering the whole (small) batch; full-dim block is legal
    else:
        # VMEM guard: double-buffered X + out tiles plus the resident W must fit with
        # headroom under the smallest scoped limit (v7x default 32 MiB).
        def footprint(t):
            return (2 * t * D * x_bytes        # X tile, double buffered
                    + 2 * t * C * 4            # out tile, double buffered
                    + 2 * D * C_pad * x_bytes  # W (resident, still double buffered)
                    + 2 * C * 4)               # b
        while TM > 8 and footprint(TM) > 24 * 1024 * 1024:
            TM = max(8, TM // 2)

    grid = (pl.cdiv(N, TM),)

    cost = pl.CostEstimate(
        flops=2 * N * D * C_pad,
        transcendentals=N * C,                                  # the exp
        bytes_accessed=(N * D * x_bytes + D * C_pad * x_bytes
                        + C * 4 + N * C * 4),
    )

    return pl.pallas_call(
        logreg_kernel,
        out_shape=jax.ShapeDtypeStruct((N, C), jnp.float32),
        grid=grid,
        in_specs=[
            pl.BlockSpec((TM, D), lambda i: (i, 0)),        # X tile streams per step
            pl.BlockSpec((D, C_pad), lambda i: (0, 0)),     # W resident (DMA once)
            pl.BlockSpec((1, C), lambda i: (0, 0)),         # b resident (DMA once)
        ],
        out_specs=pl.BlockSpec((TM, C), lambda i: (i, 0)),  # narrow, unpadded store
        compiler_params=pltpu.CompilerParams(
            dimension_semantics=("parallel",),              # megacore sharding on v7x
        ),
        cost_estimate=cost,
    )(X_in, W_in, b_in)


def _reference(X, W, b, mxu_dtype):
    # Same input quantization as the kernel; matmul accumulation and softmax in f32.
    Xc = X.astype(mxu_dtype).astype(jnp.float32)
    Wc = W.astype(mxu_dtype).astype(jnp.float32)
    return jax.nn.softmax(Xc @ Wc + b, axis=1)


if __name__ == "__main__":
    # Deterministic parameter init (torch.randn in __init__ -> jax.random.normal here).
    key = jax.random.PRNGKey(0)
    kx, kw, kb, kx2 = jax.random.split(key, 4)

    N, D, C = 8, 32, 16
    X = jax.random.normal(kx, (N, D), dtype=jnp.float32)
    W = jax.random.normal(kw, (D, C), dtype=jnp.float32)
    b = jax.random.normal(kb, (1, C), dtype=jnp.float32)

    # 1) Default path: bf16 MXU operands, f32 softmax.
    prob = jax.block_until_ready(pt_logreg_forward(X, W, b))
    ref_bf16 = _reference(X, W, b, jnp.bfloat16)
    assert prob.shape == (N, C)
    assert jnp.allclose(prob, ref_bf16, atol=1e-3, rtol=1e-3), "bf16 path mismatch"
    assert jnp.allclose(jnp.sum(prob, axis=1), 1.0, atol=1e-5), "rows must sum to 1"

    # 2) Exact f32 path vs. the exact reference.
    prob_f32 = jax.block_until_ready(pt_logreg_forward(X, W, b, mxu_dtype=jnp.float32))
    ref_f32 = _reference(X, W, b, jnp.float32)
    assert jnp.allclose(prob_f32, ref_f32, atol=1e-3, rtol=1e-3), "f32 path mismatch"
    assert jnp.allclose(jnp.sum(prob_f32, axis=1), 1.0, atol=1e-5), "rows must sum to 1"

    # 3) Multi-tile grid with a ragged tail (N=13, TM=8 -> grid=(2,), 5-row tail).
    N2 = 13
    X2 = jax.random.normal(kx2, (N2, D), dtype=jnp.float32)
    prob2 = jax.block_until_ready(pt_logreg_forward(X2, W, b, tm=8))
    ref2 = _reference(X2, W, b, jnp.bfloat16)
    assert prob2.shape == (N2, C)
    assert jnp.allclose(prob2, ref2, atol=1e-3, rtol=1e-3), "ragged-tile mismatch"
    assert jnp.allclose(jnp.sum(prob2, axis=1), 1.0, atol=1e-5), "rows must sum to 1"

    # TODO(synk): get_loss (NLL + L2 regularization) is training-time glue, not part of
    # the forward pass; left out of the kernel.
    print("KERNEL_OK")
</pallas_src>

<mosaic_0001>
module attributes {stable_mosaic.version = 11 : i64} {
  func.func @logreg_kernel(%arg0: i32, %arg1: memref<8x32xbf16, #tpu.memory_space<vmem>>, %arg2: memref<32x128xbf16, #tpu.memory_space<vmem>>, %arg3: memref<1x16xf32, #tpu.memory_space<vmem>>, %arg4: memref<8x16xf32, #tpu.memory_space<vmem>>) attributes {dimension_semantics = [#tpu.dimension_semantics<parallel>], iteration_bounds = array<i64: 1>, scalar_prefetch = 0 : i64, scratch_operands = 0 : i64, tpu.core_type = #tpu.core_type<tc>, window_params = [{transform_indices = @transform_0, window_bounds = array<i64: 8, 32>}, {pipeline_mode = #tpu.pipeline_mode<synchronous>, transform_indices = @transform_1, window_bounds = array<i64: 32, 128>}, {pipeline_mode = #tpu.pipeline_mode<synchronous>, transform_indices = @transform_2, window_bounds = array<i64: 1, 16>}, {transform_indices = @transform_3, window_bounds = array<i64: 8, 16>}]} {
    %c0 = arith.constant 0 : index
    %c0_0 = arith.constant 0 : index
    %0 = vector.load %arg1[%c0, %c0_0] : memref<8x32xbf16, #tpu.memory_space<vmem>>, vector<8x32xbf16>
    %c0_1 = arith.constant 0 : index
    %c0_2 = arith.constant 0 : index
    %1 = vector.load %arg2[%c0_1, %c0_2] : memref<32x128xbf16, #tpu.memory_space<vmem>>, vector<32x128xbf16>
    %cst = arith.constant dense<0.000000e+00> : vector<8x128xf32>
    %2 = tpu.matmul %0, %1, %cst {dimension_numbers = #tpu.dot_dimension_numbers<[1], [0], [0], [1], [0, 0, 1, 1], [], []>} : vector<8x32xbf16>, vector<32x128xbf16>, vector<8x128xf32> -> vector<8x128xf32>
    %3 = vector.extract_strided_slice %2 {offsets = [0, 0], sizes = [8, 16], strides = [1, 1]} : vector<8x128xf32> to vector<8x16xf32>
    %c0_3 = arith.constant 0 : index
    %c0_4 = arith.constant 0 : index
    %4 = vector.load %arg3[%c0_3, %c0_4] : memref<1x16xf32, #tpu.memory_space<vmem>>, vector<1x16xf32>
    %5 = vector.broadcast %4 : vector<1x16xf32> to vector<8x16xf32>
    %6 = arith.addf %3, %5 : vector<8x16xf32>
    %cst_5 = arith.constant dense<0xFF800000> : vector<8xf32>
    %7 = vector.multi_reduction <maximumf>, %6, %cst_5 [1] : vector<8x16xf32> to vector<8xf32>
    %8 = vector.shape_cast %7 : vector<8xf32> to vector<8x1xf32>
    %9 = vector.broadcast %8 : vector<8x1xf32> to vector<8x16xf32>
    %10 = arith.subf %6, %9 : vector<8x16xf32>
    %11 = math.exp %10 : vector<8x16xf32>
    %cst_6 = arith.constant dense<0.000000e+00> : vector<8xf32>
    %12 = vector.multi_reduction <add>, %11, %cst_6 [1] : vector<8x16xf32> to vector<8xf32>
    %13 = vector.shape_cast %12 : vector<8xf32> to vector<8x1xf32>
    %14 = vector.broadcast %13 : vector<8x1xf32> to vector<8x16xf32>
    %15 = arith.divf %11, %14 : vector<8x16xf32>
    %c0_7 = arith.constant 0 : index
    %c0_8 = arith.constant 0 : index
    %16 = vector.load %arg4[%c0_7, %c0_8] : memref<8x16xf32, #tpu.memory_space<vmem>>, vector<8x16xf32>
    tpu.vector_store %arg4[%c0_7, %c0_8], %15 {strides = array<i32>} : memref<8x16xf32, #tpu.memory_space<vmem>>, vector<8x16xf32>,
    return
  }
  func.func @transform_0(%arg0: i32) -> (i32, i32) {
    %c0_i32 = arith.constant 0 : i32
    %c0_i32_0 = arith.constant 0 : i32
    return %arg0, %c0_i32 : i32, i32
  }
  func.func @transform_1(%arg0: i32) -> (i32, i32) {
    %c0_i32 = arith.constant 0 : i32
    %c0_i32_0 = arith.constant 0 : i32
    %c0_i32_1 = arith.constant 0 : i32
    return %c0_i32, %c0_i32_0 : i32, i32
  }
  func.func @transform_2(%arg0: i32) -> (i32, i32) {
    %c0_i32 = arith.constant 0 : i32
    %c0_i32_0 = arith.constant 0 : i32
    %c0_i32_1 = arith.constant 0 : i32
    return %c0_i32, %c0_i32_0 : i32, i32
  }
  func.func @transform_3(%arg0: i32) -> (i32, i32) {
    %c0_i32 = arith.constant 0 : i32
    %c0_i32_0 = arith.constant 0 : i32
    return %arg0, %c0_i32 : i32, i32
  }
}

</mosaic_0001>

<llo_original>
// kernel: tpu_custom_call.1
$region0: #{tpu_custom_call.1}
  #allocation0 [shape = 'u32[]', space=smem, size = 0x4, offset = 0x4, fixed_abs, tag = 'smem constant byte address 0x4 - core index']
  #allocation1 [shape = 'u32[144,128]{1,0:T(1,128)}', space=vmem, size = 0x12000, scoped, tag = 'internal scratch']
  %s0 = inlined_call_operand.hbm [shape: bf16[8,32], index: 0, kind: input, shape index: {}]
  %s1 = inlined_call_operand.hbm [shape: bf16[32,128], index: 1, kind: input, shape index: {}]
  %s2 = inlined_call_operand.vmem [shape: f32[1,16], index: 2, kind: input, shape index: {}]
  %s3 = inlined_call_operand.hbm [shape: f32[8,16], index: 3, kind: output, shape index: {}]
  %s4 = sld [smem:[#allocation0]]
  $region30: #{tpu_custom_call.1} parent=0
    _
  %s6 = ssub.s32 1, %s4
  %s7 = scalar_select 0, %s6, %s4
  $region1: #{tpu_custom_call.1} parent=0
    #allocation2 [shape = 'u8[2048]{0}', space=vmem, size = 0x800, scoped, tag = 'input window, operand 0, single buffered']
    #allocation3 [shape = 's32[1]{0}', space=sflag, size = 0x4, scoped, tag = 'scoped memory for tpu_custom_call.1']
    #allocation4 [shape = 's32[1]{0}', space=sflag, size = 0x4, scoped, tag = 'scoped memory for tpu_custom_call.1']
    #allocation5 [shape = 'u8[8192]{0}', space=vmem, size = 0x2000, scoped, tag = 'input window, operand 1, single buffered']
    #allocation6 [shape = 's32[1]{0}', space=sflag, size = 0x4, scoped, tag = 'scoped memory for tpu_custom_call.1']
    #allocation7 [shape = 'u8[4096]{0}', space=vmem, size = 0x1000, scoped, tag = 'output window, operand 0, single buffered']
    %8 = vsyncpa [#allocation3], 0
    %9 = vsyncpa [#allocation6], 0
    %10 = vsyncpa [#allocation4], 0
    // Predicated region
    $region2: #{tpu_custom_call.1} parent=1 // pred_check
      _
    $region3: #{tpu_custom_call.1} parent=1 // pred_check_branch
      %12 = sbr.rel (0) target = $region5
    $region4: #{tpu_custom_call.1} parent=1 // pred_region
      %s14 = ssub.s32 64, 64
      %15 = vsyncadd [#allocation3], %s14
      %s17 = sshll.u32 [#allocation2], 4
      %s18 = int_to_ptr.vmem [resolvable:$true] %s17
      %20 = dma.hbm_to_vmem [thread:$0]  %s0, 64, %s18, [#allocation3]
    $region5: #{tpu_custom_call.1} parent=1 // pred_fallthru
      _
    // Predicated region
    $region6: #{tpu_custom_call.1} parent=1 // pred_check
      _
    $region7: #{tpu_custom_call.1} parent=1 // pred_check_branch
      %22 = sbr.rel (0) target = $region9
    $region8: #{tpu_custom_call.1} parent=1 // pred_region
      %s24 = ssub.s32 256, 256
      %25 = vsyncadd [#allocation6], %s24
      %s26 = sshll.u32 [#allocation5], 4
      %s27 = int_to_ptr.vmem [resolvable:$true] %s26
      %32 = dma.hbm_to_vmem [thread:$0]  %s1, 256, %s27, [#allocation6], 64, 64, 4
    $region9: #{tpu_custom_call.1} parent=1 // pred_fallthru
      _
    // Predicated region
    $region10: #{tpu_custom_call.1} parent=1 // pred_check
      _
    $region11: #{tpu_custom_call.1} parent=1 // pred_check_branch
      %34 = sbr.rel (0) target = $region13
    $region12: #{tpu_custom_call.1} parent=1 // pred_region
      _
    $region13: #{tpu_custom_call.1} parent=1 // pred_fallthru
      _
    // Predicated region
    $region14: #{tpu_custom_call.1} parent=1 // pred_check
      _
    $region15: #{tpu_custom_call.1} parent=1 // pred_check_branch
      %36 = sbr.rel (0) target = $region17
    $region16: #{tpu_custom_call.1} parent=1 // pred_region
      %37 = dma.done [#allocation3], 64
    $region17: #{tpu_custom_call.1} parent=1 // pred_fallthru
      _
    // Predicated region
    $region18: #{tpu_custom_call.1} parent=1 // pred_check
      _
    $region19: #{tpu_custom_call.1} parent=1 // pred_check_branch
      %39 = sbr.rel (0) target = $region21
    $region20: #{tpu_custom_call.1} parent=1 // pred_region
      %40 = dma.done [#allocation6], 256
    $region21: #{tpu_custom_call.1} parent=1 // pred_fallthru
      _
    %v42 = vld [vmem:[#allocation2] sm:$0xf]
    %v43 = vld [vmem:[#allocation5] sm:$0xf]
    %v44 = vld [vmem:[#allocation5 + $0x4] sm:$0xf]
    %v45 = vld [vmem:[#allocation5 + $0x8] sm:$0xf]
    %v46 = vld [vmem:[#allocation5 + $0xc] sm:$0xf]
    %v51 = vunpack.c.l.b16 %v43
    %v52 = vunpack.c.l.b16 %v44
    %v53 = vunpack.c.l.b16 %v45
    %v54 = vunpack.c.l.b16 %v46
    %v55 = vpack.c.b16 %v52, %v51
    %v56 = vpack.c.b16 %v54, %v53
    %vm59 = vcmask 261120
    %v61 = vsel %vm59, %v42, 0
    %63 = vmatprep.subr.bf16.mxu0 0
    %64 = vmatpush1.bf16.msra.mxu0 %v55
    %65 = vmatprep.subr.bf16.mxu0 0
    %66 = vmatpush1.bf16.msra.mxu0 %v56
    %67 = vmatprep.subr.bf16.mxu0 0
    %68 = vmatpush1.bf16.msra.mxu0 0
    %69 = vmatprep.subr.bf16.mxu0 0
    %70 = vmatpush1.bf16.msra.mxu0 0
    %71 = vmatprep.subr.bf16.mxu0 0
    %72 = vmatpush1.bf16.msra.mxu0 0
    %73 = vmatprep.subr.bf16.mxu0 0
    %74 = vmatpush1.bf16.msra.mxu0 0
    %75 = vmatprep.subr.bf16.mxu0 0
    %76 = vmatpush1.bf16.msra.mxu0 0
    %77 = vmatprep.subr.bf16.mxu0 0
    %78 = vmatpush1.bf16.msra.mxu0 0
    %79 = vmatprep.subr.bf16.mxu0 0
    %80 = vmatpush1.bf16.msra.mxu0 0
    %81 = vmatprep.subr.bf16.mxu0 0
    %82 = vmatpush1.bf16.msra.mxu0 0
    %83 = vmatprep.subr.bf16.mxu0 0
    %84 = vmatpush1.bf16.msra.mxu0 0
    %85 = vmatprep.subr.bf16.mxu0 0
    %86 = vmatpush1.bf16.msra.mxu0 0
    %87 = vmatprep.subr.bf16.mxu0 0
    %88 = vmatpush1.bf16.msra.mxu0 0
    %89 = vmatprep.subr.bf16.mxu0 0
    %90 = vmatpush1.bf16.msra.mxu0 0
    %91 = vmatprep.subr.bf16.mxu0 0
    %92 = vmatpush1.bf16.msra.mxu0 0
    %93 = vmatprep.subr.bf16.mxu0 0
    %94 = vmatpush1.bf16.msra.mxu0 0
    %95 = vmatprep.mubr.bf16.mxu0 0
    %96 = vmatmul.mubr.bf16.gmra.mrb[0].mxu0 %v61
    %v97 = vpop.f32.mrb[0].mxu0
    %v98 = vadd.f32 0.0, %v97
    %v99 = vpop.f32.mrb[0].mxu0
    %v100 = vpop.f32.mrb[0].mxu0
    %v101 = vpop.f32.mrb[0].mxu0
    %102 = vdwg.mxu0
    %v103 = vld [vmem:[%s2] sm:$0x1]
    %v105 = vlaneseq
    %v106 = vshrl.u32 %v105, 7
    %v107 = vsub.s32 0, %v106
    %v108 = vrot.slane %v103, %v107
    %v110 = vadd.f32 %v98, %v108
    %vm111 = vcmask 130048
    %v112 = vsel %vm111, %v110, -inf
    %113 = vmax.xlane.f32.xlu0 %v112
    %v114 = vpop.xlane.xlu0 %113
    %v115 = vsub.f32 %v110, %v114
    %v116 = vmul.f32 %v115, 1.442695
    %v117 = vpow.pop %v116
    %v118 = vsel %vm111, %v117, 0.0
    %119 = vadd.xlane.f32.xlu0 %v118
    %v120 = vpop.xlane.xlu0 %119
    %v121 = vrcp.pop %v120
    %v122 = vmul.f32 %v117, %v121
    %123 = vst.msk [vmem:[#allocation7] sm:$0xff] %vm111, %v122
    // Predicated region
    $region22: #{tpu_custom_call.1} parent=1 // pred_check
      _
    $region23: #{tpu_custom_call.1} parent=1 // pred_check_branch
      %125 = sbr.rel (0) target = $region25
    $region24: #{tpu_custom_call.1} parent=1 // pred_region
      %s127 = ssub.s32 128, 128
      %128 = vsyncadd [#allocation4], %s127
      %s130 = sshll.u32 [#allocation7], 4
      %s131 = int_to_ptr.vmem [resolvable:$true] %s130
      %133 = dma.vmem_to_hbm [thread:$0]  %s131, 128, %s3, [#allocation4]
    $region25: #{tpu_custom_call.1} parent=1 // pred_fallthru
      _
    // Predicated region
    $region26: #{tpu_custom_call.1} parent=1 // pred_check
      _
    $region27: #{tpu_custom_call.1} parent=1 // pred_check_branch
      %135 = sbr.rel (0) target = $region29
    $region28: #{tpu_custom_call.1} parent=1 // pred_region
      %136 = dma.done [#allocation4], 128
    $region29: #{tpu_custom_call.1} parent=1 // pred_fallthru
      _
    %137 = vsyncpa [#allocation3], 1
    %138 = vsyncpa [#allocation6], 1
    %139 = vsyncpa [#allocation4], 1

</llo_original>
